<compile_context>
chip_gen: v7x
topology: tpu7x:2x2x1
jax: 0.10.0
libtpu: 0.0.40
codegen_flags: <defaults>
</compile_context>

<pallas_src>
import jax
import jax.numpy as jnp
import numpy as np
from jax.experimental import pallas as pl
from jax.experimental.pallas import tpu as pltpu

_NEG = jnp.float32(-1e30)  # logit value for padded (non-existent) classes


# ----------------------------------------------------------------------------
# Fused kernel: both adapter MLPs + softmax + CE(y) + CE(z) + argmax + accuracy
# ----------------------------------------------------------------------------
def _mlp_logits(x, w1, b1, w2, b2, w3, b3):
    h1 = jnp.tanh(jnp.dot(x, w1, preferred_element_type=jnp.float32) + b1)
    h2 = jnp.tanh(jnp.dot(h1, w2, preferred_element_type=jnp.float32) + b2)
    return jnp.dot(h2, w3, preferred_element_type=jnp.float32) + b3


def _fused_kernel(x_ref, lab_ref,
                  w1y_ref, b1y_ref, w2y_ref, b2y_ref, w3y_ref, b3y_ref,
                  w1z_ref, b1z_ref, w2z_ref, b2z_ref, w3z_ref, b3z_ref,
                  slab_ref, pred_ref, stats_ref):
    x = x_ref[...]                                  # [B, D] f32
    labels = lab_ref[...]                           # [B, 1] int32
    B = x.shape[0]
    CP = w3y_ref.shape[1]                           # padded class count (128)
    inv_b = jnp.float32(1.0 / B)

    # Both adapter MLPs share the same x (one DMA, one kernel launch).
    logits_y = _mlp_logits(x, w1y_ref[...], b1y_ref[...], w2y_ref[...],
                           b2y_ref[...], w3y_ref[...], b3y_ref[...])
    logits_z = _mlp_logits(x, w1z_ref[...], b1z_ref[...], w2z_ref[...],
                           b2z_ref[...], w3z_ref[...], b3z_ref[...])

    cls_idx = jax.lax.broadcasted_iota(jnp.int32, (B, CP), 1)
    onehot = (cls_idx == labels).astype(jnp.float32)     # labels < C < CP

    def softmax_nll(logits):
        m = jnp.max(logits, axis=-1, keepdims=True)       # padded lanes = -1e30
        e = jnp.exp(logits - m)                            # padded lanes -> 0
        s = jnp.sum(e, axis=-1, keepdims=True)
        probs = e / s                                      # exact (1e-5 tol)
        logp = (logits - m) - jnp.log(s)
        nll = -jnp.sum(onehot * logp, axis=-1, keepdims=True)   # [B, 1]
        return probs, nll, m

    probs_y, nll_y, m_y = softmax_nll(logits_y)
    _, nll_z, _ = softmax_nll(logits_z)        # z probs are dead code -> DCE'd

    # Lane-dense output slab: logits in lanes [0, CP), probs in [CP, 2*CP).
    slab_ref[:, :CP] = logits_y
    slab_ref[:, CP:] = probs_y

    # argmax (first maximal index, torch-compatible) + accuracy, fused in-kernel.
    is_max = logits_y == m_y
    neg_idx = jnp.where(is_max, -cls_idx.astype(jnp.float32), jnp.float32(-CP))
    pred = (-jnp.max(neg_idx, axis=-1, keepdims=True)).astype(jnp.int32)  # [B,1]
    pred_ref[...] = pred
    correct = (pred == labels).astype(jnp.float32)

    loss_y = jnp.sum(nll_y, axis=0, keepdims=True) * inv_b     # [1, 1]
    loss_z = jnp.sum(nll_z, axis=0, keepdims=True) * inv_b
    acc = jnp.sum(correct, axis=0, keepdims=True) * inv_b

    # Pack the three scalars into one lane-dense stats row (lanes 0,1,2).
    lane = jax.lax.broadcasted_iota(jnp.int32, (1, CP), 1)
    stats_ref[...] = (jnp.where(lane == 0, loss_y, 0.0)
                      + jnp.where(lane == 1, loss_z, 0.0)
                      + jnp.where(lane == 2, acc, 0.0))


# ----------------------------------------------------------------------------
# Wrapper: one pallas_call per meta-eval step (jit this whole function)
# ----------------------------------------------------------------------------
def fused_adapter_step(x, labels, params_y, params_z):
    """Fused y/z adapter forward + CE + softmax + argmax + accuracy.

    x: [B, encoder_dim] f32, labels: [B] int32,
    params_*: (w1[D,H], b1[H], w2[H,H], b2[H], w3[H,C], b3[C]).
    Returns (logits_y [B,C], probs_y [B,C], loss_y, loss_z, acc, pred_ids [B]).
    """
    B, _ = x.shape
    H = params_y[0].shape[1]
    C = params_y[4].shape[1]
    CP = max(128, ((C + 127) // 128) * 128)   # lane-dense padded class dim

    def prep(w1, b1, w2, b2, w3, b3):
        # Pad the head so logits/probs stores are unmasked 128-lane stores.
        # Zero weight + -1e30 bias on padded classes => exp()=0, never argmax.
        w3p = jnp.zeros((H, CP), jnp.float32).at[:, :C].set(w3.astype(jnp.float32))
        b3p = jnp.full((1, CP), _NEG, jnp.float32).at[0, :C].set(b3.astype(jnp.float32))
        return (w1.astype(jnp.float32), b1.reshape(1, H).astype(jnp.float32),
                w2.astype(jnp.float32), b2.reshape(1, H).astype(jnp.float32),
                w3p, b3p)

    py = prep(*params_y)
    pz = prep(*params_z)
    labels2 = labels.reshape(B, 1).astype(jnp.int32)

    vmem = pl.BlockSpec(memory_space=pltpu.MemorySpace.VMEM)

    slab, pred, stats = pl.pallas_call(
        _fused_kernel,
        out_shape=(
            jax.ShapeDtypeStruct((B, 2 * CP), jnp.float32),   # [logits | probs]
            jax.ShapeDtypeStruct((B, 1), jnp.int32),          # predicted ids
            jax.ShapeDtypeStruct((1, CP), jnp.float32),       # loss_y/loss_z/acc
        ),
        in_specs=[vmem] * 14,
        out_specs=(vmem, vmem, vmem),
    )(x.astype(jnp.float32), labels2, *py, *pz)

    logits = slab[:, :C]
    probs = slab[:, CP:CP + C]
    return logits, probs, stats[0, 0], stats[0, 1], stats[0, 2], pred[:, 0]


# ----------------------------------------------------------------------------
# Parameter setup (deterministic, mimics nn.Linear uniform(-1/sqrt(in), ..) init)
# ----------------------------------------------------------------------------
def init_adapter(key, encoder_dim, fc_dim, n_classes):
    ks = jax.random.split(key, 6)

    def lin(kw, kb, fan_in, fan_out):
        bound = 1.0 / np.sqrt(fan_in)
        w = jax.random.uniform(kw, (fan_in, fan_out), jnp.float32, -bound, bound)
        b = jax.random.uniform(kb, (fan_out,), jnp.float32, -bound, bound)
        return w, b

    w1, b1 = lin(ks[0], ks[1], encoder_dim, fc_dim)
    w2, b2 = lin(ks[2], ks[3], fc_dim, fc_dim)
    w3, b3 = lin(ks[4], ks[5], fc_dim, n_classes)
    return (w1, b1, w2, b2, w3, b3)


def _reference(x, params, labels):
    w1, b1, w2, b2, w3, b3 = params
    h1 = jnp.tanh(x @ w1 + b1)
    h2 = jnp.tanh(h1 @ w2 + b2)
    logits = h2 @ w3 + b3
    probs = jax.nn.softmax(logits, axis=-1)
    logp = jax.nn.log_softmax(logits, axis=-1)
    loss = -jnp.mean(jnp.take_along_axis(logp, labels[:, None], axis=-1))
    return logits, probs, loss


if __name__ == "__main__":
    # Small shapes consistent with the module's adapter MLP.
    batch = 8
    encoder_dim = 32   # args.encoder_dim
    fc_dim = 32        # args.fc_dim
    n_classes = 4      # args.n_classes

    key = jax.random.PRNGKey(0)
    k_feat, k_lab, k_y, k_z = jax.random.split(key, 4)

    # Synthetic "embedding_features" standing in for predict(meta_model, input).
    embedding_features = jax.random.normal(k_feat, (batch, encoder_dim), jnp.float32)
    label_id = jax.random.randint(k_lab, (batch,), 0, n_classes, jnp.int32)

    params_y = init_adapter(k_y, encoder_dim, fc_dim, n_classes)  # adapter_model_y
    params_z = init_adapter(k_z, encoder_dim, fc_dim, n_classes)  # adapter_model_z

    # One jitted meta-eval step: single host dispatch, single pallas_call.
    meta_eval_step = jax.jit(fused_adapter_step)
    q_logits, q_probs, loss_y, loss_z, acc, pre_label_id = meta_eval_step(
        embedding_features, label_id, params_y, params_z)
    jax.block_until_ready((q_logits, q_probs, loss_y, loss_z, acc, pre_label_id))

    # Correctness checks against a pure-JAX reference of the same math.
    ref_logits, ref_probs, ref_loss_y = _reference(embedding_features, params_y, label_id)
    _, _, ref_loss_z = _reference(embedding_features, params_z, label_id)
    ref_pred = jnp.argmax(ref_probs, axis=1)
    ref_acc = jnp.mean((ref_pred == label_id).astype(jnp.float32))

    assert jnp.allclose(q_logits, ref_logits, atol=1e-5, rtol=1e-5)
    assert jnp.allclose(q_probs, ref_probs, atol=1e-5, rtol=1e-5)
    assert jnp.allclose(loss_y, ref_loss_y, atol=1e-5, rtol=1e-5)
    assert jnp.allclose(loss_z, ref_loss_z, atol=1e-5, rtol=1e-5)
    assert jnp.array_equal(pre_label_id, ref_pred)
    assert jnp.allclose(acc, ref_acc, atol=1e-6)

    print("KERNEL_OK")
</pallas_src>

<mosaic_0001>
module attributes {stable_mosaic.version = 11 : i64} {
  func.func @_fused_kernel(%arg0: memref<8x32xf32, #tpu.memory_space<vmem>>, %arg1: memref<8x1xi32, #tpu.memory_space<vmem>>, %arg2: memref<32x32xf32, #tpu.memory_space<vmem>>, %arg3: memref<1x32xf32, #tpu.memory_space<vmem>>, %arg4: memref<32x32xf32, #tpu.memory_space<vmem>>, %arg5: memref<1x32xf32, #tpu.memory_space<vmem>>, %arg6: memref<32x128xf32, #tpu.memory_space<vmem>>, %arg7: memref<1x128xf32, #tpu.memory_space<vmem>>, %arg8: memref<32x32xf32, #tpu.memory_space<vmem>>, %arg9: memref<1x32xf32, #tpu.memory_space<vmem>>, %arg10: memref<32x32xf32, #tpu.memory_space<vmem>>, %arg11: memref<1x32xf32, #tpu.memory_space<vmem>>, %arg12: memref<32x128xf32, #tpu.memory_space<vmem>>, %arg13: memref<1x128xf32, #tpu.memory_space<vmem>>, %arg14: memref<8x256xf32, #tpu.memory_space<vmem>>, %arg15: memref<8x1xi32, #tpu.memory_space<vmem>>, %arg16: memref<1x128xf32, #tpu.memory_space<vmem>>) attributes {dimension_semantics = [], scalar_prefetch = 0 : i64, scratch_operands = 0 : i64, tpu.core_type = #tpu.core_type<tc>} {
    %c0 = arith.constant 0 : index
    %c0_0 = arith.constant 0 : index
    %0 = vector.load %arg0[%c0, %c0_0] : memref<8x32xf32, #tpu.memory_space<vmem>>, vector<8x32xf32>
    %c0_1 = arith.constant 0 : index
    %c0_2 = arith.constant 0 : index
    %1 = vector.load %arg1[%c0_1, %c0_2] : memref<8x1xi32, #tpu.memory_space<vmem>>, vector<8x1xi32>
    %c0_3 = arith.constant 0 : index
    %c0_4 = arith.constant 0 : index
    %2 = vector.load %arg2[%c0_3, %c0_4] : memref<32x32xf32, #tpu.memory_space<vmem>>, vector<32x32xf32>
    %c0_5 = arith.constant 0 : index
    %c0_6 = arith.constant 0 : index
    %3 = vector.load %arg3[%c0_5, %c0_6] : memref<1x32xf32, #tpu.memory_space<vmem>>, vector<1x32xf32>
    %c0_7 = arith.constant 0 : index
    %c0_8 = arith.constant 0 : index
    %4 = vector.load %arg4[%c0_7, %c0_8] : memref<32x32xf32, #tpu.memory_space<vmem>>, vector<32x32xf32>
    %c0_9 = arith.constant 0 : index
    %c0_10 = arith.constant 0 : index
    %5 = vector.load %arg5[%c0_9, %c0_10] : memref<1x32xf32, #tpu.memory_space<vmem>>, vector<1x32xf32>
    %c0_11 = arith.constant 0 : index
    %c0_12 = arith.constant 0 : index
    %6 = vector.load %arg6[%c0_11, %c0_12] : memref<32x128xf32, #tpu.memory_space<vmem>>, vector<32x128xf32>
    %c0_13 = arith.constant 0 : index
    %c0_14 = arith.constant 0 : index
    %7 = vector.load %arg7[%c0_13, %c0_14] : memref<1x128xf32, #tpu.memory_space<vmem>>, vector<1x128xf32>
    %cst = arith.constant dense<0.000000e+00> : vector<8x32xf32>
    %8 = tpu.matmul %0, %2, %cst {dimension_numbers = #tpu.dot_dimension_numbers<[1], [0], [0], [1], [0, 0, 1, 1], [], []>} : vector<8x32xf32>, vector<32x32xf32>, vector<8x32xf32> -> vector<8x32xf32>
    %9 = vector.broadcast %3 : vector<1x32xf32> to vector<8x32xf32>
    %10 = arith.addf %8, %9 : vector<8x32xf32>
    %11 = math.tanh %10 : vector<8x32xf32>
    %cst_15 = arith.constant dense<0.000000e+00> : vector<8x32xf32>
    %12 = tpu.matmul %11, %4, %cst_15 {dimension_numbers = #tpu.dot_dimension_numbers<[1], [0], [0], [1], [0, 0, 1, 1], [], []>} : vector<8x32xf32>, vector<32x32xf32>, vector<8x32xf32> -> vector<8x32xf32>
    %13 = vector.broadcast %5 : vector<1x32xf32> to vector<8x32xf32>
    %14 = arith.addf %12, %13 : vector<8x32xf32>
    %15 = math.tanh %14 : vector<8x32xf32>
    %cst_16 = arith.constant dense<0.000000e+00> : vector<8x128xf32>
    %16 = tpu.matmul %15, %6, %cst_16 {dimension_numbers = #tpu.dot_dimension_numbers<[1], [0], [0], [1], [0, 0, 1, 1], [], []>} : vector<8x32xf32>, vector<32x128xf32>, vector<8x128xf32> -> vector<8x128xf32>
    %17 = vector.broadcast %7 : vector<1x128xf32> to vector<8x128xf32>
    %18 = arith.addf %16, %17 : vector<8x128xf32>
    %c0_17 = arith.constant 0 : index
    %c0_18 = arith.constant 0 : index
    %19 = vector.load %arg8[%c0_17, %c0_18] : memref<32x32xf32, #tpu.memory_space<vmem>>, vector<32x32xf32>
    %c0_19 = arith.constant 0 : index
    %c0_20 = arith.constant 0 : index
    %20 = vector.load %arg9[%c0_19, %c0_20] : memref<1x32xf32, #tpu.memory_space<vmem>>, vector<1x32xf32>
    %c0_21 = arith.constant 0 : index
    %c0_22 = arith.constant 0 : index
    %21 = vector.load %arg10[%c0_21, %c0_22] : memref<32x32xf32, #tpu.memory_space<vmem>>, vector<32x32xf32>
    %c0_23 = arith.constant 0 : index
    %c0_24 = arith.constant 0 : index
    %22 = vector.load %arg11[%c0_23, %c0_24] : memref<1x32xf32, #tpu.memory_space<vmem>>, vector<1x32xf32>
    %c0_25 = arith.constant 0 : index
    %c0_26 = arith.constant 0 : index
    %23 = vector.load %arg12[%c0_25, %c0_26] : memref<32x128xf32, #tpu.memory_space<vmem>>, vector<32x128xf32>
    %c0_27 = arith.constant 0 : index
    %c0_28 = arith.constant 0 : index
    %24 = vector.load %arg13[%c0_27, %c0_28] : memref<1x128xf32, #tpu.memory_space<vmem>>, vector<1x128xf32>
    %cst_29 = arith.constant dense<0.000000e+00> : vector<8x32xf32>
    %25 = tpu.matmul %0, %19, %cst_29 {dimension_numbers = #tpu.dot_dimension_numbers<[1], [0], [0], [1], [0, 0, 1, 1], [], []>} : vector<8x32xf32>, vector<32x32xf32>, vector<8x32xf32> -> vector<8x32xf32>
    %26 = vector.broadcast %20 : vector<1x32xf32> to vector<8x32xf32>
    %27 = arith.addf %25, %26 : vector<8x32xf32>
    %28 = math.tanh %27 : vector<8x32xf32>
    %cst_30 = arith.constant dense<0.000000e+00> : vector<8x32xf32>
    %29 = tpu.matmul %28, %21, %cst_30 {dimension_numbers = #tpu.dot_dimension_numbers<[1], [0], [0], [1], [0, 0, 1, 1], [], []>} : vector<8x32xf32>, vector<32x32xf32>, vector<8x32xf32> -> vector<8x32xf32>
    %30 = vector.broadcast %22 : vector<1x32xf32> to vector<8x32xf32>
    %31 = arith.addf %29, %30 : vector<8x32xf32>
    %32 = math.tanh %31 : vector<8x32xf32>
    %cst_31 = arith.constant dense<0.000000e+00> : vector<8x128xf32>
    %33 = tpu.matmul %32, %23, %cst_31 {dimension_numbers = #tpu.dot_dimension_numbers<[1], [0], [0], [1], [0, 0, 1, 1], [], []>} : vector<8x32xf32>, vector<32x128xf32>, vector<8x128xf32> -> vector<8x128xf32>
    %34 = vector.broadcast %24 : vector<1x128xf32> to vector<8x128xf32>
    %35 = arith.addf %33, %34 : vector<8x128xf32>
    %36 = tpu.iota {dimensions = array<i32: 1>} : vector<8x128xi32>
    %37 = vector.broadcast %1 : vector<8x1xi32> to vector<8x128xi32>
    %38 = arith.cmpi eq, %36, %37 : vector<8x128xi32>
    %39 = arith.extui %38 : vector<8x128xi1> to vector<8x128xi32>
    %40 = arith.sitofp %39 : vector<8x128xi32> to vector<8x128xf32>
    %cst_32 = arith.constant dense<0xFF800000> : vector<8xf32>
    %41 = vector.multi_reduction <maximumf>, %18, %cst_32 [1] : vector<8x128xf32> to vector<8xf32>
    %42 = vector.shape_cast %41 : vector<8xf32> to vector<8x1xf32>
    %43 = vector.broadcast %42 : vector<8x1xf32> to vector<8x128xf32>
    %44 = arith.subf %18, %43 : vector<8x128xf32>
    %45 = math.exp %44 : vector<8x128xf32>
    %cst_33 = arith.constant dense<0.000000e+00> : vector<8xf32>
    %46 = vector.multi_reduction <add>, %45, %cst_33 [1] : vector<8x128xf32> to vector<8xf32>
    %47 = vector.shape_cast %46 : vector<8xf32> to vector<8x1xf32>
    %48 = vector.broadcast %47 : vector<8x1xf32> to vector<8x128xf32>
    %49 = arith.divf %45, %48 : vector<8x128xf32>
    %50 = vector.broadcast %42 : vector<8x1xf32> to vector<8x128xf32>
    %51 = arith.subf %18, %50 : vector<8x128xf32>
    %52 = math.log %47 : vector<8x1xf32>
    %53 = vector.broadcast %52 : vector<8x1xf32> to vector<8x128xf32>
    %54 = arith.subf %51, %53 : vector<8x128xf32>
    %55 = arith.mulf %40, %54 : vector<8x128xf32>
    %cst_34 = arith.constant dense<0.000000e+00> : vector<8xf32>
    %56 = vector.multi_reduction <add>, %55, %cst_34 [1] : vector<8x128xf32> to vector<8xf32>
    %57 = vector.shape_cast %56 : vector<8xf32> to vector<8x1xf32>
    %cst_35 = arith.constant 0.000000e+00 : f32
    %58 = vector.broadcast %cst_35 : f32 to vector<8x1xf32>
    %59 = arith.subf %58, %57 : vector<8x1xf32>
    %cst_36 = arith.constant dense<0xFF800000> : vector<8xf32>
    %60 = vector.multi_reduction <maximumf>, %35, %cst_36 [1] : vector<8x128xf32> to vector<8xf32>
    %61 = vector.shape_cast %60 : vector<8xf32> to vector<8x1xf32>
    %62 = vector.broadcast %61 : vector<8x1xf32> to vector<8x128xf32>
    %63 = arith.subf %35, %62 : vector<8x128xf32>
    %64 = math.exp %63 : vector<8x128xf32>
    %cst_37 = arith.constant dense<0.000000e+00> : vector<8xf32>
    %65 = vector.multi_reduction <add>, %64, %cst_37 [1] : vector<8x128xf32> to vector<8xf32>
    %66 = vector.shape_cast %65 : vector<8xf32> to vector<8x1xf32>
    %67 = vector.broadcast %61 : vector<8x1xf32> to vector<8x128xf32>
    %68 = arith.subf %35, %67 : vector<8x128xf32>
    %69 = math.log %66 : vector<8x1xf32>
    %70 = vector.broadcast %69 : vector<8x1xf32> to vector<8x128xf32>
    %71 = arith.subf %68, %70 : vector<8x128xf32>
    %72 = arith.mulf %40, %71 : vector<8x128xf32>
    %cst_38 = arith.constant dense<0.000000e+00> : vector<8xf32>
    %73 = vector.multi_reduction <add>, %72, %cst_38 [1] : vector<8x128xf32> to vector<8xf32>
    %74 = vector.shape_cast %73 : vector<8xf32> to vector<8x1xf32>
    %cst_39 = arith.constant 0.000000e+00 : f32
    %75 = vector.broadcast %cst_39 : f32 to vector<8x1xf32>
    %76 = arith.subf %75, %74 : vector<8x1xf32>
    %c0_40 = arith.constant 0 : index
    %c0_41 = arith.constant 0 : index
    %77 = vector.load %arg14[%c0_40, %c0_41] : memref<8x256xf32, #tpu.memory_space<vmem>>, vector<8x128xf32>
    tpu.vector_store %arg14[%c0_40, %c0_41], %18 {strides = array<i32>} : memref<8x256xf32, #tpu.memory_space<vmem>>, vector<8x128xf32>,
    %c0_42 = arith.constant 0 : index
    %c128 = arith.constant 128 : index
    %78 = vector.load %arg14[%c0_42, %c128] : memref<8x256xf32, #tpu.memory_space<vmem>>, vector<8x128xf32>
    tpu.vector_store %arg14[%c0_42, %c128], %49 {strides = array<i32>} : memref<8x256xf32, #tpu.memory_space<vmem>>, vector<8x128xf32>,
    %79 = vector.broadcast %42 : vector<8x1xf32> to vector<8x128xf32>
    %80 = arith.cmpf oeq, %18, %79 : vector<8x128xf32>
    %81 = arith.sitofp %36 : vector<8x128xi32> to vector<8x128xf32>
    %cst_43 = arith.constant 0.000000e+00 : f32
    %82 = vector.broadcast %cst_43 : f32 to vector<8x128xf32>
    %83 = arith.subf %82, %81 : vector<8x128xf32>
    %cst_44 = arith.constant -1.280000e+02 : f32
    %84 = vector.broadcast %cst_44 : f32 to vector<8x128xf32>
    %85 = arith.select %80, %83, %84 : vector<8x128xi1>, vector<8x128xf32>
    %cst_45 = arith.constant dense<0xFF800000> : vector<8xf32>
    %86 = vector.multi_reduction <maximumf>, %85, %cst_45 [1] : vector<8x128xf32> to vector<8xf32>
    %87 = vector.shape_cast %86 : vector<8xf32> to vector<8x1xf32>
    %cst_46 = arith.constant 0.000000e+00 : f32
    %88 = vector.broadcast %cst_46 : f32 to vector<8x1xf32>
    %89 = arith.subf %88, %87 : vector<8x1xf32>
    %90 = arith.fptosi %89 : vector<8x1xf32> to vector<8x1xi32>
    %c0_47 = arith.constant 0 : index
    %c0_48 = arith.constant 0 : index
    %91 = vector.load %arg15[%c0_47, %c0_48] : memref<8x1xi32, #tpu.memory_space<vmem>>, vector<8x1xi32>
    tpu.vector_store %arg15[%c0_47, %c0_48], %90 {strides = array<i32>} : memref<8x1xi32, #tpu.memory_space<vmem>>, vector<8x1xi32>,
    %92 = arith.cmpi eq, %90, %1 : vector<8x1xi32>
    %93 = arith.extui %92 : vector<8x1xi1> to vector<8x1xi32>
    %94 = arith.sitofp %93 : vector<8x1xi32> to vector<8x1xf32>
    %cst_49 = arith.constant dense<0.000000e+00> : vector<1xf32>
    %95 = vector.multi_reduction <add>, %59, %cst_49 [0] : vector<8x1xf32> to vector<1xf32>
    %96 = vector.shape_cast %95 : vector<1xf32> to vector<1x1xf32>
    %cst_50 = arith.constant 1.250000e-01 : f32
    %97 = vector.broadcast %cst_50 : f32 to vector<1x1xf32>
    %98 = arith.mulf %96, %97 : vector<1x1xf32>
    %cst_51 = arith.constant dense<0.000000e+00> : vector<1xf32>
    %99 = vector.multi_reduction <add>, %76, %cst_51 [0] : vector<8x1xf32> to vector<1xf32>
    %100 = vector.shape_cast %99 : vector<1xf32> to vector<1x1xf32>
    %cst_52 = arith.constant 1.250000e-01 : f32
    %101 = vector.broadcast %cst_52 : f32 to vector<1x1xf32>
    %102 = arith.mulf %100, %101 : vector<1x1xf32>
    %cst_53 = arith.constant dense<0.000000e+00> : vector<1xf32>
    %103 = vector.multi_reduction <add>, %94, %cst_53 [0] : vector<8x1xf32> to vector<1xf32>
    %104 = vector.shape_cast %103 : vector<1xf32> to vector<1x1xf32>
    %cst_54 = arith.constant 1.250000e-01 : f32
    %105 = vector.broadcast %cst_54 : f32 to vector<1x1xf32>
    %106 = arith.mulf %104, %105 : vector<1x1xf32>
    %107 = tpu.iota {dimensions = array<i32: 1>} : vector<1x128xi32>
    %c0_i32 = arith.constant 0 : i32
    %108 = vector.broadcast %c0_i32 : i32 to vector<1x128xi32>
    %109 = arith.cmpi eq, %107, %108 : vector<1x128xi32>
    %cst_55 = arith.constant 0.000000e+00 : f32
    %110 = vector.shape_cast %98 : vector<1x1xf32> to vector<1x1xf32>
    %111 = vector.broadcast %110 : vector<1x1xf32> to vector<1x128xf32>
    %112 = vector.broadcast %cst_55 : f32 to vector<1x128xf32>
    %113 = arith.select %109, %111, %112 : vector<1x128xi1>, vector<1x128xf32>
    %c1_i32 = arith.constant 1 : i32
    %114 = vector.broadcast %c1_i32 : i32 to vector<1x128xi32>
    %115 = arith.cmpi eq, %107, %114 : vector<1x128xi32>
    %cst_56 = arith.constant 0.000000e+00 : f32
    %116 = vector.shape_cast %102 : vector<1x1xf32> to vector<1x1xf32>
    %117 = vector.broadcast %116 : vector<1x1xf32> to vector<1x128xf32>
    %118 = vector.broadcast %cst_56 : f32 to vector<1x128xf32>
    %119 = arith.select %115, %117, %118 : vector<1x128xi1>, vector<1x128xf32>
    %120 = arith.addf %113, %119 : vector<1x128xf32>
    %c2_i32 = arith.constant 2 : i32
    %121 = vector.broadcast %c2_i32 : i32 to vector<1x128xi32>
    %122 = arith.cmpi eq, %107, %121 : vector<1x128xi32>
    %cst_57 = arith.constant 0.000000e+00 : f32
    %123 = vector.shape_cast %106 : vector<1x1xf32> to vector<1x1xf32>
    %124 = vector.broadcast %123 : vector<1x1xf32> to vector<1x128xf32>
    %125 = vector.broadcast %cst_57 : f32 to vector<1x128xf32>
    %126 = arith.select %122, %124, %125 : vector<1x128xi1>, vector<1x128xf32>
    %127 = arith.addf %120, %126 : vector<1x128xf32>
    %c0_58 = arith.constant 0 : index
    %c0_59 = arith.constant 0 : index
    %128 = vector.load %arg16[%c0_58, %c0_59] : memref<1x128xf32, #tpu.memory_space<vmem>>, vector<1x128xf32>
    tpu.vector_store %arg16[%c0_58, %c0_59], %127 {strides = array<i32>} : memref<1x128xf32, #tpu.memory_space<vmem>>, vector<1x128xf32>,
    return
  }
}

</mosaic_0001>

<llo_original>
// kernel: fused_adapter_step.1
$region0: #{fused_adapter_step.1}
  #allocation0 [shape = 'u32[]', space=smem, size = 0x4, offset = 0x4, fixed_abs, tag = 'smem constant byte address 0x4 - core index']
  #allocation1 [shape = 'u32[144,128]{1,0:T(1,128)}', space=vmem, size = 0x12000, scoped, tag = 'internal scratch']
  %s0 = inlined_call_operand.vmem [shape: f32[8,32], index: 0, kind: input, shape index: {}]
  %s1 = inlined_call_operand.vmem [shape: s32[8,1], index: 1, kind: input, shape index: {}]
  %s2 = inlined_call_operand.vmem [shape: f32[32,32], index: 2, kind: input, shape index: {}]
  %s3 = inlined_call_operand.vmem [shape: f32[1,32], index: 3, kind: input, shape index: {}]
  %s4 = inlined_call_operand.vmem [shape: f32[32,32], index: 4, kind: input, shape index: {}]
  %s5 = inlined_call_operand.vmem [shape: f32[1,32], index: 5, kind: input, shape index: {}]
  %s6 = inlined_call_operand.vmem [shape: f32[32,128], index: 6, kind: input, shape index: {}]
  %s7 = inlined_call_operand.vmem [shape: f32[1,128], index: 7, kind: input, shape index: {}]
  %s8 = inlined_call_operand.vmem [shape: f32[32,32], index: 8, kind: input, shape index: {}]
  %s9 = inlined_call_operand.vmem [shape: f32[1,32], index: 9, kind: input, shape index: {}]
  %s10 = inlined_call_operand.vmem [shape: f32[32,32], index: 10, kind: input, shape index: {}]
  %s11 = inlined_call_operand.vmem [shape: f32[1,32], index: 11, kind: input, shape index: {}]
  %s12 = inlined_call_operand.vmem [shape: f32[32,128], index: 12, kind: input, shape index: {}]
  %s13 = inlined_call_operand.vmem [shape: f32[1,128], index: 13, kind: input, shape index: {}]
  %s14 = inlined_call_operand.vmem [shape: f32[8,256], index: 14, kind: output, shape index: {0}]
  %s15 = inlined_call_operand.vmem [shape: s32[8,1], index: 15, kind: output, shape index: {1}]
  %s16 = inlined_call_operand.vmem [shape: f32[1,128], index: 16, kind: output, shape index: {2}]
  %17 = xla_tuple %s14, %s15, %s16
  %s18 = sld [smem:[#allocation0]]
  $region82: #{fused_adapter_step.1} parent=0
    _
  %s20 = ssub.s32 1, %s18
  %s21 = scalar_select 0, %s20, %s18
  // Predicated region
  $region2: #{fused_adapter_step.1} parent=0 // pred_check
    _
  $region3: #{fused_adapter_step.1} parent=0 // pred_check_branch
    %23 = sbr.rel (0) target = $region5
  $region4: #{fused_adapter_step.1} parent=0 // pred_region
    _
  $region5: #{fused_adapter_step.1} parent=0 // pred_fallthru
    _
  // Predicated region
  $region6: #{fused_adapter_step.1} parent=0 // pred_check
    _
  $region7: #{fused_adapter_step.1} parent=0 // pred_check_branch
    %25 = sbr.rel (0) target = $region9
  $region8: #{fused_adapter_step.1} parent=0 // pred_region
    _
  $region9: #{fused_adapter_step.1} parent=0 // pred_fallthru
    _
  // Predicated region
  $region10: #{fused_adapter_step.1} parent=0 // pred_check
    _
  $region11: #{fused_adapter_step.1} parent=0 // pred_check_branch
    %27 = sbr.rel (0) target = $region13
  $region12: #{fused_adapter_step.1} parent=0 // pred_region
    _
  $region13: #{fused_adapter_step.1} parent=0 // pred_fallthru
    _
  // Predicated region
  $region14: #{fused_adapter_step.1} parent=0 // pred_check
    _
  $region15: #{fused_adapter_step.1} parent=0 // pred_check_branch
    %29 = sbr.rel (0) target = $region17
  $region16: #{fused_adapter_step.1} parent=0 // pred_region
    _
  $region17: #{fused_adapter_step.1} parent=0 // pred_fallthru
    _
  // Predicated region
  $region18: #{fused_adapter_step.1} parent=0 // pred_check
    _
  $region19: #{fused_adapter_step.1} parent=0 // pred_check_branch
    %31 = sbr.rel (0) target = $region21
  $region20: #{fused_adapter_step.1} parent=0 // pred_region
    _
  $region21: #{fused_adapter_step.1} parent=0 // pred_fallthru
    _
  // Predicated region
  $region22: #{fused_adapter_step.1} parent=0 // pred_check
    _
  $region23: #{fused_adapter_step.1} parent=0 // pred_check_branch
    %33 = sbr.rel (0) target = $region25
  $region24: #{fused_adapter_step.1} parent=0 // pred_region
    _
  $region25: #{fused_adapter_step.1} parent=0 // pred_fallthru
    _
  // Predicated region
  $region26: #{fused_adapter_step.1} parent=0 // pred_check
    _
  $region27: #{fused_adapter_step.1} parent=0 // pred_check_branch
    %35 = sbr.rel (0) target = $region29
  $region28: #{fused_adapter_step.1} parent=0 // pred_region
    _
  $region29: #{fused_adapter_step.1} parent=0 // pred_fallthru
    _
  // Predicated region
  $region30: #{fused_adapter_step.1} parent=0 // pred_check
    _
  $region31: #{fused_adapter_step.1} parent=0 // pred_check_branch
    %37 = sbr.rel (0) target = $region33
  $region32: #{fused_adapter_step.1} parent=0 // pred_region
    _
  $region33: #{fused_adapter_step.1} parent=0 // pred_fallthru
    _
  // Predicated region
  $region34: #{fused_adapter_step.1} parent=0 // pred_check
    _
  $region35: #{fused_adapter_step.1} parent=0 // pred_check_branch
    %39 = sbr.rel (0) target = $region37
  $region36: #{fused_adapter_step.1} parent=0 // pred_region
    _
  $region37: #{fused_adapter_step.1} parent=0 // pred_fallthru
    _
  // Predicated region
  $region38: #{fused_adapter_step.1} parent=0 // pred_check
    _
  $region39: #{fused_adapter_step.1} parent=0 // pred_check_branch
    %41 = sbr.rel (0) target = $region41
  $region40: #{fused_adapter_step.1} parent=0 // pred_region
    _
  $region41: #{fused_adapter_step.1} parent=0 // pred_fallthru
    _
  // Predicated region
  $region42: #{fused_adapter_step.1} parent=0 // pred_check
    _
  $region43: #{fused_adapter_step.1} parent=0 // pred_check_branch
    %43 = sbr.rel (0) target = $region45
  $region44: #{fused_adapter_step.1} parent=0 // pred_region
    _
  $region45: #{fused_adapter_step.1} parent=0 // pred_fallthru
    _
  // Predicated region
  $region46: #{fused_adapter_step.1} parent=0 // pred_check
    _
  $region47: #{fused_adapter_step.1} parent=0 // pred_check_branch
    %45 = sbr.rel (0) target = $region49
  $region48: #{fused_adapter_step.1} parent=0 // pred_region
    _
  $region49: #{fused_adapter_step.1} parent=0 // pred_fallthru
    _
  // Predicated region
  $region50: #{fused_adapter_step.1} parent=0 // pred_check
    _
  $region51: #{fused_adapter_step.1} parent=0 // pred_check_branch
    %47 = sbr.rel (0) target = $region53
  $region52: #{fused_adapter_step.1} parent=0 // pred_region
    _
  $region53: #{fused_adapter_step.1} parent=0 // pred_fallthru
    _
  // Predicated region
  $region54: #{fused_adapter_step.1} parent=0 // pred_check
    _
  $region55: #{fused_adapter_step.1} parent=0 // pred_check_branch
    %49 = sbr.rel (0) target = $region57
  $region56: #{fused_adapter_step.1} parent=0 // pred_region
    _
  $region57: #{fused_adapter_step.1} parent=0 // pred_fallthru
    _
  %v50 = vld [vmem:[%s0] sm:$0xff]
  %v51 = vld [vmem:[%s1] sm:$0xff]
  %v52 = vld [vmem:[%s2] sm:$0xff]
  %v53 = vld [vmem:[%s2 + $0x8] sm:$0xff]
  %v54 = vld [vmem:[%s2 + $0x10] sm:$0xff]
  %v55 = vld [vmem:[%s2 + $0x18] sm:$0xff]
  %v56 = vld [vmem:[%s3] sm:$0x1]
  %v57 = vld [vmem:[%s4] sm:$0xff]
  %v58 = vld [vmem:[%s4 + $0x8] sm:$0xff]
  %v59 = vld [vmem:[%s4 + $0x10] sm:$0xff]
  %v60 = vld [vmem:[%s4 + $0x18] sm:$0xff]
  %v61 = vld [vmem:[%s5] sm:$0x1]
  %v62 = vld [vmem:[%s6] sm:$0xff]
  %v63 = vld [vmem:[%s6 + $0x8] sm:$0xff]
  %v64 = vld [vmem:[%s6 + $0x10] sm:$0xff]
  %v65 = vld [vmem:[%s6 + $0x18] sm:$0xff]
  %v66 = vld [vmem:[%s7] sm:$0x1]
  %v68 = vlaneseq
  %v69 = vshrl.u32 %v68, 7
  %v70 = vsub.s32 0, %v69
  %v71 = vrot.slane %v56, %v70
  %vm73 = vcmask 261120
  %v75 = vsel %vm73, %v50, 0
  %77 = vmatprep.subr.mxu0 0.0
  %78 = vmatpush1.msra.mxu0 %v52
  %79 = vmatprep.subr.mxu0 0.0
  %80 = vmatpush1.msra.mxu0 %v53
  %81 = vmatprep.subr.mxu0 0.0
  %82 = vmatpush1.msra.mxu0 %v54
  %83 = vmatprep.subr.mxu0 0.0
  %84 = vmatpush1.msra.mxu0 %v55
  %85 = vmatprep.subr.mxu0 0.0
  %86 = vmatpush1.msra.mxu0 0.0
  %87 = vmatprep.subr.mxu0 0.0
  %88 = vmatpush1.msra.mxu0 0.0
  %89 = vmatprep.subr.mxu0 0.0
  %90 = vmatpush1.msra.mxu0 0.0
  %91 = vmatprep.subr.mxu0 0.0
  %92 = vmatpush1.msra.mxu0 0.0
  %93 = vmatprep.subr.mxu0 0.0
  %94 = vmatpush1.msra.mxu0 0.0
  %95 = vmatprep.subr.mxu0 0.0
  %96 = vmatpush1.msra.mxu0 0.0
  %97 = vmatprep.subr.mxu0 0.0
  %98 = vmatpush1.msra.mxu0 0.0
  %99 = vmatprep.subr.mxu0 0.0
  %100 = vmatpush1.msra.mxu0 0.0
  %101 = vmatprep.subr.mxu0 0.0
  %102 = vmatpush1.msra.mxu0 0.0
  %103 = vmatprep.subr.mxu0 0.0
  %104 = vmatpush1.msra.mxu0 0.0
  %105 = vmatprep.subr.mxu0 0.0
  %106 = vmatpush1.msra.mxu0 0.0
  %107 = vmatprep.subr.mxu0 0.0
  %108 = vmatpush1.msra.mxu0 0.0
  %109 = vmatprep.subr.mxu0 0.0
  %110 = vmatpush1.msra.mxu0 0.0
  %111 = vmatprep.subr.mxu0 0.0
  %112 = vmatpush1.msra.mxu0 0.0
  %113 = vmatprep.subr.mxu0 0.0
  %114 = vmatpush1.msra.mxu0 0.0
  %115 = vmatprep.subr.mxu0 0.0
  %116 = vmatpush1.msra.mxu0 0.0
  %117 = vmatprep.subr.mxu0 0.0
  %118 = vmatpush1.msra.mxu0 0.0
  %119 = vmatprep.subr.mxu0 0.0
  %120 = vmatpush1.msra.mxu0 0.0
  %121 = vmatprep.subr.mxu0 0.0
  %122 = vmatpush1.msra.mxu0 0.0
  %123 = vmatprep.subr.mxu0 0.0
  %124 = vmatpush1.msra.mxu0 0.0
  %125 = vmatprep.subr.mxu0 0.0
  %126 = vmatpush1.msra.mxu0 0.0
  %127 = vmatprep.subr.mxu0 0.0
  %128 = vmatpush1.msra.mxu0 0.0
  %129 = vmatprep.subr.mxu0 0.0
  %130 = vmatpush1.msra.mxu0 0.0
  %131 = vmatprep.subr.mxu0 0.0
  %132 = vmatpush1.msra.mxu0 0.0
  %133 = vmatprep.subr.mxu0 0.0
  %134 = vmatpush1.msra.mxu0 0.0
  %135 = vmatprep.subr.mxu0 0.0
  %136 = vmatpush1.msra.mxu0 0.0
  %137 = vmatprep.subr.mxu0 0.0
  %138 = vmatpush1.msra.mxu0 0.0
  %139 = vmatprep.subr.mxu0 0.0
  %140 = vmatpush1.msra.mxu0 0.0
  %141 = vmatprep.mubr.f32.mxu0 0.0
  %142 = vmatmul.mubr.f32.gmra.mrb[0].mxu0 %v75
  %v143 = vpop.f32.mrb[0].mxu0
  %v144 = vadd.f32 %v71, %v143
  %v145 = vpop.f32.mrb[0].mxu0
  %146 = vdwg.mxu0
  %v147 = vtanh.pop %v144
  %v149 = vlaneseq
  %v150 = vshrl.u32 %v149, 7
  %v151 = vsub.s32 0, %v150
  %v152 = vrot.slane %v61, %v151
  %v155 = vsel %vm73, %v147, 0
  %157 = vmatprep.subr.mxu0 0.0
  %158 = vmatpush1.msra.mxu0 %v57
  %159 = vmatprep.subr.mxu0 0.0
  %160 = vmatpush1.msra.mxu0 %v58
  %161 = vmatprep.subr.mxu0 0.0
  %162 = vmatpush1.msra.mxu0 %v59
  %163 = vmatprep.subr.mxu0 0.0
  %164 = vmatpush1.msra.mxu0 %v60
  %165 = vmatprep.subr.mxu0 0.0
  %166 = vmatpush1.msra.mxu0 0.0
  %167 = vmatprep.subr.mxu0 0.0
  %168 = vmatpush1.msra.mxu0 0.0
  %169 = vmatprep.subr.mxu0 0.0
  %170 = vmatpush1.msra.mxu0 0.0
  %171 = vmatprep.subr.mxu0 0.0
  %172 = vmatpush1.msra.mxu0 0.0
  %173 = vmatprep.subr.mxu0 0.0
  %174 = vmatpush1.msra.mxu0 0.0
  %175 = vmatprep.subr.mxu0 0.0
  %176 = vmatpush1.msra.mxu0 0.0
  %177 = vmatprep.subr.mxu0 0.0
  %178 = vmatpush1.msra.mxu0 0.0
  %179 = vmatprep.subr.mxu0 0.0
  %180 = vmatpush1.msra.mxu0 0.0
  %181 = vmatprep.subr.mxu0 0.0
  %182 = vmatpush1.msra.mxu0 0.0
  %183 = vmatprep.subr.mxu0 0.0
  %184 = vmatpush1.msra.mxu0 0.0
  %185 = vmatprep.subr.mxu0 0.0
  %186 = vmatpush1.msra.mxu0 0.0
  %187 = vmatprep.subr.mxu0 0.0
  %188 = vmatpush1.msra.mxu0 0.0
  %189 = vmatprep.subr.mxu0 0.0
  %190 = vmatpush1.msra.mxu0 0.0
  %191 = vmatprep.subr.mxu0 0.0
  %192 = vmatpush1.msra.mxu0 0.0
  %193 = vmatprep.subr.mxu0 0.0
  %194 = vmatpush1.msra.mxu0 0.0
  %195 = vmatprep.subr.mxu0 0.0
  %196 = vmatpush1.msra.mxu0 0.0
  %197 = vmatprep.subr.mxu0 0.0
  %198 = vmatpush1.msra.mxu0 0.0
  %199 = vmatprep.subr.mxu0 0.0
  %200 = vmatpush1.msra.mxu0 0.0
  %201 = vmatprep.subr.mxu0 0.0
  %202 = vmatpush1.msra.mxu0 0.0
  %203 = vmatprep.subr.mxu0 0.0
  %204 = vmatpush1.msra.mxu0 0.0
  %205 = vmatprep.subr.mxu0 0.0
  %206 = vmatpush1.msra.mxu0 0.0
  %207 = vmatprep.subr.mxu0 0.0
  %208 = vmatpush1.msra.mxu0 0.0
  %209 = vmatprep.subr.mxu0 0.0
  %210 = vmatpush1.msra.mxu0 0.0
  %211 = vmatprep.subr.mxu0 0.0
  %212 = vmatpush1.msra.mxu0 0.0
  %213 = vmatprep.subr.mxu0 0.0
  %214 = vmatpush1.msra.mxu0 0.0
  %215 = vmatprep.subr.mxu0 0.0
  %216 = vmatpush1.msra.mxu0 0.0
  %217 = vmatprep.subr.mxu0 0.0
  %218 = vmatpush1.msra.mxu0 0.0
  %219 = vmatprep.subr.mxu0 0.0
  %220 = vmatpush1.msra.mxu0 0.0
  %221 = vmatprep.mubr.f32.mxu0 0.0
  %222 = vmatmul.mubr.f32.gmra.mrb[0].mxu0 %v155
  %v223 = vpop.f32.mrb[0].mxu0
  %v224 = vadd.f32 %v152, %v223
  %v225 = vpop.f32.mrb[0].mxu0
  %226 = vdwg.mxu0
  %v227 = vtanh.pop %v224
  %v229 = vlaneseq
  %v230 = vshrl.u32 %v229, 7
  %v231 = vsub.s32 0, %v230
  %v232 = vrot.slane %v66, %v231
  %v235 = vsel %vm73, %v227, 0
  %237 = vmatprep.subr.mxu0 0.0
  %238 = vmatpush1.msra.mxu0 %v62
  %239 = vmatprep.subr.mxu0 0.0
  %240 = vmatpush1.msra.mxu0 %v63
  %241 = vmatprep.subr.mxu0 0.0
  %242 = vmatpush1.msra.mxu0 %v64
  %243 = vmatprep.subr.mxu0 0.0
  %244 = vmatpush1.msra.mxu0 %v65
  %245 = vmatprep.subr.mxu0 0.0
  %246 = vmatpush1.msra.mxu0 0.0
  %247 = vmatprep.subr.mxu0 0.0
  %248 = vmatpush1.msra.mxu0 0.0
  %249 = vmatprep.subr.mxu0 0.0
  %250 = vmatpush1.msra.mxu0 0.0
  %251 = vmatprep.subr.mxu0 0.0
  %252 = vmatpush1.msra.mxu0 0.0
  %253 = vmatprep.subr.mxu0 0.0
  %254 = vmatpush1.msra.mxu0 0.0
  %255 = vmatprep.subr.mxu0 0.0
  %256 = vmatpush1.msra.mxu0 0.0
  %257 = vmatprep.subr.mxu0 0.0
  %258 = vmatpush1.msra.mxu0 0.0
  %259 = vmatprep.subr.mxu0 0.0
  %260 = vmatpush1.msra.mxu0 0.0
  %261 = vmatprep.subr.mxu0 0.0
  %262 = vmatpush1.msra.mxu0 0.0
  %263 = vmatprep.subr.mxu0 0.0
  %264 = vmatpush1.msra.mxu0 0.0
  %265 = vmatprep.subr.mxu0 0.0
  %266 = vmatpush1.msra.mxu0 0.0
  %267 = vmatprep.subr.mxu0 0.0
  %268 = vmatpush1.msra.mxu0 0.0
  %269 = vmatprep.subr.mxu0 0.0
  %270 = vmatpush1.msra.mxu0 0.0
  %271 = vmatprep.subr.mxu0 0.0
  %272 = vmatpush1.msra.mxu0 0.0
  %273 = vmatprep.subr.mxu0 0.0
  %274 = vmatpush1.msra.mxu0 0.0
  %275 = vmatprep.subr.mxu0 0.0
  %276 = vmatpush1.msra.mxu0 0.0
  %277 = vmatprep.subr.mxu0 0.0
  %278 = vmatpush1.msra.mxu0 0.0
  %279 = vmatprep.subr.mxu0 0.0
  %280 = vmatpush1.msra.mxu0 0.0
  %281 = vmatprep.subr.mxu0 0.0
  %282 = vmatpush1.msra.mxu0 0.0
  %283 = vmatprep.subr.mxu0 0.0
  %284 = vmatpush1.msra.mxu0 0.0
  %285 = vmatprep.subr.mxu0 0.0
  %286 = vmatpush1.msra.mxu0 0.0
  %287 = vmatprep.subr.mxu0 0.0
  %288 = vmatpush1.msra.mxu0 0.0
  %289 = vmatprep.subr.mxu0 0.0
  %290 = vmatpush1.msra.mxu0 0.0
  %291 = vmatprep.subr.mxu0 0.0
  %292 = vmatpush1.msra.mxu0 0.0
  %293 = vmatprep.subr.mxu0 0.0
  %294 = vmatpush1.msra.mxu0 0.0
  %295 = vmatprep.subr.mxu0 0.0
  %296 = vmatpush1.msra.mxu0 0.0
  %297 = vmatprep.subr.mxu0 0.0
  %298 = vmatpush1.msra.mxu0 0.0
  %299 = vmatprep.subr.mxu0 0.0
  %300 = vmatpush1.msra.mxu0 0.0
  %301 = vmatprep.mubr.f32.mxu0 0.0
  %302 = vmatmul.mubr.f32.gmra.mrb[0].mxu0 %v235
  %v303 = vpop.f32.mrb[0].mxu0
  %v304 = vadd.f32 %v232, %v303
  %v305 = vpop.f32.mrb[0].mxu0
  %306 = vdwg.mxu0
  %v307 = vld [vmem:[%s8] sm:$0xff]
  %v308 = vld [vmem:[%s8 + $0x8] sm:$0xff]
  %v309 = vld [vmem:[%s8 + $0x10] sm:$0xff]
  %v310 = vld [vmem:[%s8 + $0x18] sm:$0xff]
  %v311 = vld [vmem:[%s9] sm:$0x1]
  %v312 = vld [vmem:[%s10] sm:$0xff]
  %v313 = vld [vmem:[%s10 + $0x8] sm:$0xff]
  %v314 = vld [vmem:[%s10 + $0x10] sm:$0xff]
  %v315 = vld [vmem:[%s10 + $0x18] sm:$0xff]
  %v316 = vld [vmem:[%s11] sm:$0x1]
  %v317 = vld [vmem:[%s12] sm:$0xff]
  %v318 = vld [vmem:[%s12 + $0x8] sm:$0xff]
  %v319 = vld [vmem:[%s12 + $0x10] sm:$0xff]
  %v320 = vld [vmem:[%s12 + $0x18] sm:$0xff]
  %v321 = vld [vmem:[%s13] sm:$0x1]
  %v323 = vlaneseq
  %v324 = vshrl.u32 %v323, 7
  %v325 = vsub.s32 0, %v324
  %v326 = vrot.slane %v311, %v325
  %328 = vmatprep.subr.mxu0 0.0
  %329 = vmatpush1.msra.mxu0 %v307
  %330 = vmatprep.subr.mxu0 0.0
  %331 = vmatpush1.msra.mxu0 %v308
  %332 = vmatprep.subr.mxu0 0.0
  %333 = vmatpush1.msra.mxu0 %v309
  %334 = vmatprep.subr.mxu0 0.0
  %335 = vmatpush1.msra.mxu0 %v310
  %336 = vmatprep.subr.mxu0 0.0
  %337 = vmatpush1.msra.mxu0 0.0
  %338 = vmatprep.subr.mxu0 0.0
  %339 = vmatpush1.msra.mxu0 0.0
  %340 = vmatprep.subr.mxu0 0.0
  %341 = vmatpush1.msra.mxu0 0.0
  %342 = vmatprep.subr.mxu0 0.0
  %343 = vmatpush1.msra.mxu0 0.0
  %344 = vmatprep.subr.mxu0 0.0
  %345 = vmatpush1.msra.mxu0 0.0
  %346 = vmatprep.subr.mxu0 0.0
  %347 = vmatpush1.msra.mxu0 0.0
  %348 = vmatprep.subr.mxu0 0.0
  %349 = vmatpush1.msra.mxu0 0.0
  %350 = vmatprep.subr.mxu0 0.0
  %351 = vmatpush1.msra.mxu0 0.0
  %352 = vmatprep.subr.mxu0 0.0
  %353 = vmatpush1.msra.mxu0 0.0
  %354 = vmatprep.subr.mxu0 0.0
  %355 = vmatpush1.msra.mxu0 0.0
  %356 = vmatprep.subr.mxu0 0.0
  %357 = vmatpush1.msra.mxu0 0.0
  %358 = vmatprep.subr.mxu0 0.0
  %359 = vmatpush1.msra.mxu0 0.0
  %360 = vmatprep.subr.mxu0 0.0
  %361 = vmatpush1.msra.mxu0 0.0
  %362 = vmatprep.subr.mxu0 0.0
  %363 = vmatpush1.msra.mxu0 0.0
  %364 = vmatprep.subr.mxu0 0.0
  %365 = vmatpush1.msra.mxu0 0.0
  %366 = vmatprep.subr.mxu0 0.0
  %367 = vmatpush1.msra.mxu0 0.0
  %368 = vmatprep.subr.mxu0 0.0
  %369 = vmatpush1.msra.mxu0 0.0
  %370 = vmatprep.subr.mxu0 0.0
  %371 = vmatpush1.msra.mxu0 0.0
  %372 = vmatprep.subr.mxu0 0.0
  %373 = vmatpush1.msra.mxu0 0.0
  %374 = vmatprep.subr.mxu0 0.0
  %375 = vmatpush1.msra.mxu0 0.0
  %376 = vmatprep.subr.mxu0 0.0
  %377 = vmatpush1.msra.mxu0 0.0
  %378 = vmatprep.subr.mxu0 0.0
  %379 = vmatpush1.msra.mxu0 0.0
  %380 = vmatprep.subr.mxu0 0.0
  %381 = vmatpush1.msra.mxu0 0.0
  %382 = vmatprep.subr.mxu0 0.0
  %383 = vmatpush1.msra.mxu0 0.0
  %384 = vmatprep.subr.mxu0 0.0
  %385 = vmatpush1.msra.mxu0 0.0
  %386 = vmatprep.subr.mxu0 0.0
  %387 = vmatpush1.msra.mxu0 0.0
  %388 = vmatprep.subr.mxu0 0.0
  %389 = vmatpush1.msra.mxu0 0.0
  %390 = vmatprep.subr.mxu0 0.0
  %391 = vmatpush1.msra.mxu0 0.0
  %392 = vmatprep.mubr.f32.mxu0 0.0
  %393 = vmatmul.mubr.f32.gmra.mrb[0].mxu0 %v75
  %v394 = vpop.f32.mrb[0].mxu0
  %v395 = vadd.f32 %v326, %v394
  %v396 = vpop.f32.mrb[0].mxu0
  %397 = vdwg.mxu0
  %v398 = vtanh.pop %v395
  %v400 = vlaneseq
  %v401 = vshrl.u32 %v400, 7
  %v402 = vsub.s32 0, %v401
  %v403 = vrot.slane %v316, %v402
  %v406 = vsel %vm73, %v398, 0
  %408 = vmatprep.subr.mxu0 0.0
  %409 = vmatpush1.msra.mxu0 %v312
  %410 = vmatprep.subr.mxu0 0.0
  %411 = vmatpush1.msra.mxu0 %v313
  %412 = vmatprep.subr.mxu0 0.0
  %413 = vmatpush1.msra.mxu0 %v314
  %414 = vmatprep.subr.mxu0 0.0
  %415 = vmatpush1.msra.mxu0 %v315
  %416 = vmatprep.subr.mxu0 0.0
  %417 = vmatpush1.msra.mxu0 0.0
  %418 = vmatprep.subr.mxu0 0.0
  %419 = vmatpush1.msra.mxu0 0.0
  %420 = vmatprep.subr.mxu0 0.0
  %421 = vmatpush1.msra.mxu0 0.0
  %422 = vmatprep.subr.mxu0 0.0
  %423 = vmatpush1.msra.mxu0 0.0
  %424 = vmatprep.subr.mxu0 0.0
  %425 = vmatpush1.msra.mxu0 0.0
  %426 = vmatprep.subr.mxu0 0.0
  %427 = vmatpush1.msra.mxu0 0.0
  %428 = vmatprep.subr.mxu0 0.0
  %429 = vmatpush1.msra.mxu0 0.0
  %430 = vmatprep.subr.mxu0 0.0
  %431 = vmatpush1.msra.mxu0 0.0
  %432 = vmatprep.subr.mxu0 0.0
  %433 = vmatpush1.msra.mxu0 0.0
  %434 = vmatprep.subr.mxu0 0.0
  %435 = vmatpush1.msra.mxu0 0.0
  %436 = vmatprep.subr.mxu0 0.0
  %437 = vmatpush1.msra.mxu0 0.0
  %438 = vmatprep.subr.mxu0 0.0
  %439 = vmatpush1.msra.mxu0 0.0
  %440 = vmatprep.subr.mxu0 0.0
  %441 = vmatpush1.msra.mxu0 0.0
  %442 = vmatprep.subr.mxu0 0.0
  %443 = vmatpush1.msra.mxu0 0.0
  %444 = vmatprep.subr.mxu0 0.0
  %445 = vmatpush1.msra.mxu0 0.0
  %446 = vmatprep.subr.mxu0 0.0
  %447 = vmatpush1.msra.mxu0 0.0
  %448 = vmatprep.subr.mxu0 0.0
  %449 = vmatpush1.msra.mxu0 0.0
  %450 = vmatprep.subr.mxu0 0.0
  %451 = vmatpush1.msra.mxu0 0.0
  %452 = vmatprep.subr.mxu0 0.0
  %453 = vmatpush1.msra.mxu0 0.0
  %454 = vmatprep.subr.mxu0 0.0
  %455 = vmatpush1.msra.mxu0 0.0
  %456 = vmatprep.subr.mxu0 0.0
  %457 = vmatpush1.msra.mxu0 0.0
  %458 = vmatprep.subr.mxu0 0.0
  %459 = vmatpush1.msra.mxu0 0.0
  %460 = vmatprep.subr.mxu0 0.0
  %461 = vmatpush1.msra.mxu0 0.0
  %462 = vmatprep.subr.mxu0 0.0
  %463 = vmatpush1.msra.mxu0 0.0
  %464 = vmatprep.subr.mxu0 0.0
  %465 = vmatpush1.msra.mxu0 0.0
  %466 = vmatprep.subr.mxu0 0.0
  %467 = vmatpush1.msra.mxu0 0.0
  %468 = vmatprep.subr.mxu0 0.0
  %469 = vmatpush1.msra.mxu0 0.0
  %470 = vmatprep.subr.mxu0 0.0
  %471 = vmatpush1.msra.mxu0 0.0
  %472 = vmatprep.mubr.f32.mxu0 0.0
  %473 = vmatmul.mubr.f32.gmra.mrb[0].mxu0 %v406
  %v474 = vpop.f32.mrb[0].mxu0
  %v475 = vadd.f32 %v403, %v474
  %v476 = vpop.f32.mrb[0].mxu0
  %477 = vdwg.mxu0
  %v478 = vtanh.pop %v475
  %v480 = vlaneseq
  %v481 = vshrl.u32 %v480, 7
  %v482 = vsub.s32 0, %v481
  %v483 = vrot.slane %v321, %v482
  %v486 = vsel %vm73, %v478, 0
  %488 = vmatprep.subr.mxu0 0.0
  %489 = vmatpush1.msra.mxu0 %v317
  %490 = vmatprep.subr.mxu0 0.0
  %491 = vmatpush1.msra.mxu0 %v318
  %492 = vmatprep.subr.mxu0 0.0
  %493 = vmatpush1.msra.mxu0 %v319
  %494 = vmatprep.subr.mxu0 0.0
  %495 = vmatpush1.msra.mxu0 %v320
  %496 = vmatprep.subr.mxu0 0.0
  %497 = vmatpush1.msra.mxu0 0.0
  %498 = vmatprep.subr.mxu0 0.0
  %499 = vmatpush1.msra.mxu0 0.0
  %500 = vmatprep.subr.mxu0 0.0
  %501 = vmatpush1.msra.mxu0 0.0
  %502 = vmatprep.subr.mxu0 0.0
  %503 = vmatpush1.msra.mxu0 0.0
  %504 = vmatprep.subr.mxu0 0.0
  %505 = vmatpush1.msra.mxu0 0.0
  %506 = vmatprep.subr.mxu0 0.0
  %507 = vmatpush1.msra.mxu0 0.0
  %508 = vmatprep.subr.mxu0 0.0
  %509 = vmatpush1.msra.mxu0 0.0
  %510 = vmatprep.subr.mxu0 0.0
  %511 = vmatpush1.msra.mxu0 0.0
  %512 = vmatprep.subr.mxu0 0.0
  %513 = vmatpush1.msra.mxu0 0.0
  %514 = vmatprep.subr.mxu0 0.0
  %515 = vmatpush1.msra.mxu0 0.0
  %516 = vmatprep.subr.mxu0 0.0
  %517 = vmatpush1.msra.mxu0 0.0
  %518 = vmatprep.subr.mxu0 0.0
  %519 = vmatpush1.msra.mxu0 0.0
  %520 = vmatprep.subr.mxu0 0.0
  %521 = vmatpush1.msra.mxu0 0.0
  %522 = vmatprep.subr.mxu0 0.0
  %523 = vmatpush1.msra.mxu0 0.0
  %524 = vmatprep.subr.mxu0 0.0
  %525 = vmatpush1.msra.mxu0 0.0
  %526 = vmatprep.subr.mxu0 0.0
  %527 = vmatpush1.msra.mxu0 0.0
  %528 = vmatprep.subr.mxu0 0.0
  %529 = vmatpush1.msra.mxu0 0.0
  %530 = vmatprep.subr.mxu0 0.0
  %531 = vmatpush1.msra.mxu0 0.0
  %532 = vmatprep.subr.mxu0 0.0
  %533 = vmatpush1.msra.mxu0 0.0
  %534 = vmatprep.subr.mxu0 0.0
  %535 = vmatpush1.msra.mxu0 0.0
  %536 = vmatprep.subr.mxu0 0.0
  %537 = vmatpush1.msra.mxu0 0.0
  %538 = vmatprep.subr.mxu0 0.0
  %539 = vmatpush1.msra.mxu0 0.0
  %540 = vmatprep.subr.mxu0 0.0
  %541 = vmatpush1.msra.mxu0 0.0
  %542 = vmatprep.subr.mxu0 0.0
  %543 = vmatpush1.msra.mxu0 0.0
  %544 = vmatprep.subr.mxu0 0.0
  %545 = vmatpush1.msra.mxu0 0.0
  %546 = vmatprep.subr.mxu0 0.0
  %547 = vmatpush1.msra.mxu0 0.0
  %548 = vmatprep.subr.mxu0 0.0
  %549 = vmatpush1.msra.mxu0 0.0
  %550 = vmatprep.subr.mxu0 0.0
  %551 = vmatpush1.msra.mxu0 0.0
  %552 = vmatprep.mubr.f32.mxu0 0.0
  %553 = vmatmul.mubr.f32.gmra.mrb[0].mxu0 %v486
  %v554 = vpop.f32.mrb[0].mxu0
  %v555 = vadd.f32 %v483, %v554
  %v556 = vpop.f32.mrb[0].mxu0
  %557 = vdwg.mxu0
  %v558 = vlaneseq
  %v559 = vand.u32 %v558, 127
  %560 = vset.pattern.permute.xlu0 0
  %561 = vperm.xlu0 %560, %v51
  %v562 = vpop.permute.xlu0 %561
  %vm563 = vcmp.eq.s32.totalorder %v559, %v562
  %v564 = vsel %vm563, 1, 0
  %v565 = vcvt.s32.f32 %v564
  %566 = vmax.xlane.f32.xlu0 %v304
  %v567 = vpop.xlane.xlu0 %566
  %v568 = vsub.f32 %v304, %v567
  %v569 = vmul.f32 %v568, 1.442695
  %v570 = vpow.pop %v569
  %571 = vadd.xlane.f32.xlu0 %v570
  %v572 = vpop.xlane.xlu0 %571
  %v573 = vrcp.pop %v572
  %v574 = vmul.f32 %v570, %v573
  %v575 = vlog2.pop %v572
  %v576 = vmul.f32 %v575, 0.6931472
  %v577 = vsub.f32 %v568, %v576
  %v578 = vmul.f32 %v565, %v577
  %579 = vadd.xlane.f32.xlu0 %v578
  %v580 = vpop.xlane.xlu0 %579
  %v581 = vsub.f32 0.0, %v580
  %582 = vmax.xlane.f32.xlu0 %v555
  %v583 = vpop.xlane.xlu0 %582
  %v584 = vsub.f32 %v555, %v583
  %v585 = vmul.f32 %v584, 1.442695
  %v586 = vpow.pop %v585
  %587 = vadd.xlane.f32.xlu0 %v586
  %v588 = vpop.xlane.xlu0 %587
  %v589 = vlog2.pop %v588
  %v590 = vmul.f32 %v589, 0.6931472
  %v591 = vsub.f32 %v584, %v590
  %v592 = vmul.f32 %v565, %v591
  %593 = vadd.xlane.f32.xlu0 %v592
  %v594 = vpop.xlane.xlu0 %593
  %v595 = vsub.f32 0.0, %v594
  %596 = vst [vmem:[%s14] sm:$0xff] %v304
  %597 = vst [vmem:[%s14 + $0x8] sm:$0xff] %v574
  %vm598 = vcmp.eq.f32.partialorder %v304, %v567
  %v599 = vcvt.s32.f32 %v559
  %v600 = vsub.f32 0.0, %v599
  %v601 = vsel %vm598, %v600, -128.0
  %602 = vmax.xlane.f32.xlu0 %v601
  %v603 = vpop.xlane.xlu0 %602
  %v604 = vsub.f32 0.0, %v603
  %v605 = vcvt.f32.s32.to.zero.pseudo %v604
  %vm606 = vcmask 7168
  %607 = vst.msk [vmem:[%s15] sm:$0xff] %vm606, %v605
  %vm608 = vcmp.eq.s32.totalorder %v605, %v51
  %v609 = vsel %vm608, 1, 0
  %v610 = vcvt.s32.f32 %v609
  %v611 = vrot.slane %v581, 4
  %v612 = vadd.f32 %v581, %v611
  %v613 = vrot.slane %v612, 2
  %v614 = vadd.f32 %v612, %v613
  %v615 = vrot.slane %v614, 1
  %v616 = vadd.f32 %v614, %v615
  %v617 = vmul.f32 %v616, 0.125
  %v618 = vrot.slane %v595, 4
  %v619 = vadd.f32 %v595, %v618
  %v620 = vrot.slane %v619, 2
  %v621 = vadd.f32 %v619, %v620
  %v622 = vrot.slane %v621, 1
  %v623 = vadd.f32 %v621, %v622
  %v624 = vmul.f32 %v623, 0.125
  %v625 = vsel %vm606, %v610, 0.0
  %v626 = vrot.slane %v625, 4
  %v627 = vadd.f32 %v625, %v626
  %v628 = vrot.slane %v627, 2
  %v629 = vadd.f32 %v627, %v628
  %v630 = vrot.slane %v629, 1
  %v631 = vadd.f32 %v629, %v630
  %v632 = vmul.f32 %v631, 0.125
  %vm633 = vcmp.eq.s32.totalorder %v559, 0
  %v634 = vsel %vm633, %v617, 0.0
  %vm635 = vcmp.eq.s32.totalorder %v559, 1
  %v636 = vsel %vm635, %v624, 0.0
  %v637 = vadd.f32 %v634, %v636
  %vm638 = vcmp.eq.s32.totalorder %v559, 2
  %640 = vset.pattern.permute.xlu0 0
  %641 = vperm.xlu0 %640, %v632
  %v642 = vpop.permute.xlu0 %641
  %v644 = vsel %vm638, %v642, 0.0
  %v645 = vadd.f32 %v637, %v644
  %646 = vst [vmem:[%s16] sm:$0x1] %v645
  // Predicated region
  $region58: #{fused_adapter_step.1} parent=0 // pred_check
    _
  $region59: #{fused_adapter_step.1} parent=0 // pred_check_branch
    %648 = sbr.rel (0) target = $region61
  $region60: #{fused_adapter_step.1} parent=0 // pred_region
    _
  $region61: #{fused_adapter_step.1} parent=0 // pred_fallthru
    _
  // Predicated region
  $region62: #{fused_adapter_step.1} parent=0 // pred_check
    _
  $region63: #{fused_adapter_step.1} parent=0 // pred_check_branch
    %650 = sbr.rel (0) target = $region65
  $region64: #{fused_adapter_step.1} parent=0 // pred_region
    _
  $region65: #{fused_adapter_step.1} parent=0 // pred_fallthru
    _
  // Predicated region
  $region66: #{fused_adapter_step.1} parent=0 // pred_check
    _
  $region67: #{fused_adapter_step.1} parent=0 // pred_check_branch
    %652 = sbr.rel (0) target = $region69
  $region68: #{fused_adapter_step.1} parent=0 // pred_region
    _
  $region69: #{fused_adapter_step.1} parent=0 // pred_fallthru
    _
  // Predicated region
  $region70: #{fused_adapter_step.1} parent=0 // pred_check
    _
  $region71: #{fused_adapter_step.1} parent=0 // pred_check_branch
    %654 = sbr.rel (0) target = $region73
  $region72: #{fused_adapter_step.1} parent=0 // pred_region
    _
  $region73: #{fused_adapter_step.1} parent=0 // pred_fallthru
    _
  // Predicated region
  $region74: #{fused_adapter_step.1} parent=0 // pred_check
    _
  $region75: #{fused_adapter_step.1} parent=0 // pred_check_branch
    %656 = sbr.rel (0) target = $region77
  $region76: #{fused_adapter_step.1} parent=0 // pred_region
    _
  $region77: #{fused_adapter_step.1} parent=0 // pred_fallthru
    _
  // Predicated region
  $region78: #{fused_adapter_step.1} parent=0 // pred_check
    _
  $region79: #{fused_adapter_step.1} parent=0 // pred_check_branch
    %658 = sbr.rel (0) target = $region81
  $region80: #{fused_adapter_step.1} parent=0 // pred_region
    _
  $region81: #{fused_adapter_step.1} parent=0 // pred_fallthru
    _

</llo_original>
